<compile_context>
chip_gen: v7x
topology: tpu7x:2x2x1
jax: 0.10.0
libtpu: 0.0.40
codegen_flags: <defaults>
</compile_context>

<pallas_src>
import functools

import jax
import jax.numpy as jnp
from jax.experimental import pallas as pl
from jax.experimental.pallas import tpu as pltpu


def _critic_kernel(state_ref, action_ref, wh_ref, w1x_ref, w1a_ref, slab_ref,
                   out_ref, *, act, head, hid):
    f32 = jnp.float32

    bh = slab_ref[0:1, :head]        # (1, head) f32
    b1 = slab_ref[1:2, :hid]         # (1, hid)  f32
    wt = slab_ref[2:3, :hid]         # (1, hid)  f32  (tail weight as a row)
    bt = slab_ref[3:4, 0:1]          # (1, 1)    f32

    # Head: relu(state @ Wh + bh)  -- bf16 MXU operands, f32 accumulate.
    x = jnp.dot(state_ref[...], wh_ref[...], preferred_element_type=f32)
    x = jnp.maximum(x + bh, 0.0)

    # Hidden layer on concat([x, action]):
    #   relu(cat(x, a) @ W1 + b1) == relu(x @ W1[:head] + a @ W1[head:] + b1)
    # x-part on the MXU; the K=act (=4) action part as unrolled f32 VPU FMAs.
    z = jnp.dot(x.astype(jnp.bfloat16), w1x_ref[...],
                preferred_element_type=f32)
    a = action_ref[...]              # (TM, act) f32
    w1a = w1a_ref[...]               # (act, hid) f32 (full precision)
    for k in range(act):             # static unroll
        z = z + a[:, k:k + 1] * w1a[k:k + 1, :]
    h = jnp.maximum(z + b1, 0.0)

    # Tail: VPU multiply + lane reduce (XLU) -> (TM, 1); no MXU, no padding.
    out_ref[...] = jnp.sum(h * wt, axis=-1, keepdims=True) + bt


@functools.partial(jax.jit, static_argnames=("tm",))
def critic_forward(state, action, params, *, tm=None):
    """state: (B, OBS) bf16, action: (B, ACT) f32. Returns Q of shape (B, 1) f32."""
    wh, w1x, w1a, slab = params
    B, obs = state.shape
    act = action.shape[1]
    head = wh.shape[1]
    hid = w1x.shape[1]

    if tm is None:
        tm = min(1024, B)
        # v7x has 2 TensorCores: keep >=2 parallel grid steps when possible.
        if B >= 16 and B // tm < 2:
            tm = B // 2
    tm = min(tm, B)
    assert tm % 8 == 0, "row block must be a multiple of 8 (sublane)"
    assert B % tm == 0, "batch must be a multiple of the row-block size"
    grid = (B // tm,)

    kernel = functools.partial(_critic_kernel, act=act, head=head, hid=hid)

    flops = 2 * B * (obs * head + head * hid + act * hid + hid)
    bytes_accessed = (state.size * state.dtype.itemsize
                      + action.size * 4
                      + wh.size * wh.dtype.itemsize
                      + w1x.size * w1x.dtype.itemsize
                      + w1a.size * 4
                      + slab.size * 4
                      + B * 4)

    out = pl.pallas_call(
        kernel,
        out_shape=jax.ShapeDtypeStruct((B, 1), jnp.float32),
        grid_spec=pltpu.PrefetchScalarGridSpec(
            num_scalar_prefetch=0,
            grid=grid,
            in_specs=[
                pl.BlockSpec((tm, obs), lambda i: (i, 0)),     # state rows
                pl.BlockSpec((tm, act), lambda i: (i, 0)),     # action rows
                pl.BlockSpec((obs, head), lambda i: (0, 0)),   # Wh (resident)
                pl.BlockSpec((head, hid), lambda i: (0, 0)),   # W1 x-rows (resident)
                pl.BlockSpec((act, hid), lambda i: (0, 0)),    # W1 action rows, f32
                pl.BlockSpec(slab.shape, lambda i: (0, 0)),    # bias/tail slab
            ],
            out_specs=pl.BlockSpec((tm, 1), lambda i: (i, 0)),
        ),
        compiler_params=pltpu.CompilerParams(
            dimension_semantics=("parallel",)),
        cost_estimate=pl.CostEstimate(flops=flops, transcendentals=0,
                                      bytes_accessed=bytes_accessed),
    )(state, action, wh, w1x, w1a, slab)

    return out


def init_params(key, obs_size, action_size, head_size, hidden_size,
                mxu_dtype=jnp.bfloat16):
    """Synthetic init. Returns (packed kernel params, raw f32 params)."""
    ks = jax.random.split(key, 6)
    scale = 0.1
    wh = scale * jax.random.normal(ks[0], (obs_size, head_size), jnp.float32)
    bh = scale * jax.random.normal(ks[1], (1, head_size), jnp.float32)
    w1 = scale * jax.random.normal(ks[2], (head_size + action_size, hidden_size),
                                   jnp.float32)
    b1 = scale * jax.random.normal(ks[3], (1, hidden_size), jnp.float32)
    wt = scale * jax.random.normal(ks[4], (hidden_size, 1), jnp.float32)
    bt = scale * jax.random.normal(ks[5], (1, 1), jnp.float32)

    # Split W1: x-rows go to the MXU in bf16, action rows stay f32 (VPU path).
    w1x = w1[:head_size].astype(mxu_dtype)
    w1a = w1[head_size:]

    # One (4, max(head, hid)) f32 slab:
    #   row 0 = bh, row 1 = b1, row 2 = wt (as a row), row 3 lane 0 = bt.
    W = max(head_size, hidden_size)
    slab = jnp.zeros((4, W), jnp.float32)
    slab = slab.at[0, :head_size].set(bh[0])
    slab = slab.at[1, :hidden_size].set(b1[0])
    slab = slab.at[2, :hidden_size].set(wt[:, 0])
    slab = slab.at[3, 0].set(bt[0, 0])

    packed = (wh.astype(mxu_dtype), w1x, w1a, slab)
    raw = (wh, bh, w1, b1, wt, bt)
    return packed, raw


def reference_forward(state, action, raw_params):
    """Plain-JAX f32 reference with the PyTorch module's semantics."""
    wh, bh, w1, b1, wt, bt = raw_params
    x = jnp.maximum(state @ wh + bh, 0.0)
    cat = jnp.concatenate([x, action], axis=1)
    h = jnp.maximum(cat @ w1 + b1, 0.0)
    return h @ wt + bt


if __name__ == "__main__":
    # Config mirroring:
    #   CriticNetwork(observation_size=16, action_size=4,
    #                 layers=[{'activation': 'relu', 'size': 32},
    #                         {'activation': 'relu', 'size': 32}], seed=0)
    B = 256            # two 128-row parallel grid steps (both v7x TCs get work)
    OBS, ACT = 16, 4
    HEAD, HID = 32, 32

    key = jax.random.PRNGKey(0)
    k_state, k_action, k_params = jax.random.split(key, 3)
    state_f32 = jax.random.normal(k_state, (B, OBS), jnp.float32)
    action_f32 = jax.random.normal(k_action, (B, ACT), jnp.float32)
    packed, raw = init_params(k_params, OBS, ACT, HEAD, HID)

    # MXU operands in bf16; the action stream stays f32 (pure VPU path).
    state = state_f32.astype(jnp.bfloat16)
    action = action_f32

    q = critic_forward(state, action, packed)
    q = jax.block_until_ready(q)

    q_ref = reference_forward(state_f32, action_f32, raw)
    assert q.shape == (B, 1)
    # bf16 MXU operands -> looser agreement with the pure-f32 reference.
    assert jnp.allclose(q, q_ref, atol=2e-2, rtol=2e-2), "mismatch vs reference"

    print("KERNEL_OK")
</pallas_src>

<mosaic_0001>
module attributes {stable_mosaic.version = 11 : i64} {
  func.func @_critic_kernel(%arg0: i32, %arg1: memref<128x16xbf16, #tpu.memory_space<vmem>>, %arg2: memref<128x4xf32, #tpu.memory_space<vmem>>, %arg3: memref<16x32xbf16, #tpu.memory_space<vmem>>, %arg4: memref<32x32xbf16, #tpu.memory_space<vmem>>, %arg5: memref<4x32xf32, #tpu.memory_space<vmem>>, %arg6: memref<4x32xf32, #tpu.memory_space<vmem>>, %arg7: memref<128x1xf32, #tpu.memory_space<vmem>>) attributes {dimension_semantics = [#tpu.dimension_semantics<parallel>], iteration_bounds = array<i64: 2>, scalar_prefetch = 0 : i64, scratch_operands = 0 : i64, tpu.core_type = #tpu.core_type<tc>, window_params = [{transform_indices = @transform_0, window_bounds = array<i64: 128, 16>}, {transform_indices = @transform_1, window_bounds = array<i64: 128, 4>}, {pipeline_mode = #tpu.pipeline_mode<synchronous>, transform_indices = @transform_2, window_bounds = array<i64: 16, 32>}, {pipeline_mode = #tpu.pipeline_mode<synchronous>, transform_indices = @transform_3, window_bounds = array<i64: 32, 32>}, {pipeline_mode = #tpu.pipeline_mode<synchronous>, transform_indices = @transform_4, window_bounds = array<i64: 4, 32>}, {pipeline_mode = #tpu.pipeline_mode<synchronous>, transform_indices = @transform_5, window_bounds = array<i64: 4, 32>}, {transform_indices = @transform_6, window_bounds = array<i64: 128, 1>}]} {
    %c0 = arith.constant 0 : index
    %c0_0 = arith.constant 0 : index
    %0 = vector.load %arg6[%c0, %c0_0] : memref<4x32xf32, #tpu.memory_space<vmem>>, vector<1x32xf32>
    %c1 = arith.constant 1 : index
    %c0_1 = arith.constant 0 : index
    %1 = vector.load %arg6[%c1, %c0_1] : memref<4x32xf32, #tpu.memory_space<vmem>>, vector<1x32xf32>
    %c2 = arith.constant 2 : index
    %c0_2 = arith.constant 0 : index
    %2 = vector.load %arg6[%c2, %c0_2] : memref<4x32xf32, #tpu.memory_space<vmem>>, vector<1x32xf32>
    %c3 = arith.constant 3 : index
    %c0_3 = arith.constant 0 : index
    %3 = vector.load %arg6[%c3, %c0_3] : memref<4x32xf32, #tpu.memory_space<vmem>>, vector<1x1xf32>
    %c0_4 = arith.constant 0 : index
    %c0_5 = arith.constant 0 : index
    %4 = vector.load %arg1[%c0_4, %c0_5] : memref<128x16xbf16, #tpu.memory_space<vmem>>, vector<128x16xbf16>
    %c0_6 = arith.constant 0 : index
    %c0_7 = arith.constant 0 : index
    %5 = vector.load %arg3[%c0_6, %c0_7] : memref<16x32xbf16, #tpu.memory_space<vmem>>, vector<16x32xbf16>
    %cst = arith.constant dense<0.000000e+00> : vector<128x32xf32>
    %6 = tpu.matmul %4, %5, %cst {dimension_numbers = #tpu.dot_dimension_numbers<[1], [0], [0], [1], [0, 0, 1, 1], [], []>} : vector<128x16xbf16>, vector<16x32xbf16>, vector<128x32xf32> -> vector<128x32xf32>
    %7 = vector.broadcast %0 : vector<1x32xf32> to vector<128x32xf32>
    %8 = arith.addf %6, %7 : vector<128x32xf32>
    %cst_8 = arith.constant 0.000000e+00 : f32
    %9 = vector.broadcast %cst_8 : f32 to vector<128x32xf32>
    %10 = arith.maximumf %8, %9 : vector<128x32xf32>
    %11 = arith.truncf %10 : vector<128x32xf32> to vector<128x32xbf16>
    %c0_9 = arith.constant 0 : index
    %c0_10 = arith.constant 0 : index
    %12 = vector.load %arg4[%c0_9, %c0_10] : memref<32x32xbf16, #tpu.memory_space<vmem>>, vector<32x32xbf16>
    %cst_11 = arith.constant dense<0.000000e+00> : vector<128x32xf32>
    %13 = tpu.matmul %11, %12, %cst_11 {dimension_numbers = #tpu.dot_dimension_numbers<[1], [0], [0], [1], [0, 0, 1, 1], [], []>} : vector<128x32xbf16>, vector<32x32xbf16>, vector<128x32xf32> -> vector<128x32xf32>
    %c0_12 = arith.constant 0 : index
    %c0_13 = arith.constant 0 : index
    %14 = vector.load %arg2[%c0_12, %c0_13] : memref<128x4xf32, #tpu.memory_space<vmem>>, vector<128x4xf32>
    %c0_14 = arith.constant 0 : index
    %c0_15 = arith.constant 0 : index
    %15 = vector.load %arg5[%c0_14, %c0_15] : memref<4x32xf32, #tpu.memory_space<vmem>>, vector<4x32xf32>
    %16 = vector.extract_strided_slice %14 {offsets = [0, 0], sizes = [128, 1], strides = [1, 1]} : vector<128x4xf32> to vector<128x1xf32>
    %17 = vector.extract_strided_slice %15 {offsets = [0, 0], sizes = [1, 32], strides = [1, 1]} : vector<4x32xf32> to vector<1x32xf32>
    %18 = vector.broadcast %16 : vector<128x1xf32> to vector<128x32xf32>
    %19 = vector.broadcast %17 : vector<1x32xf32> to vector<128x32xf32>
    %20 = arith.mulf %18, %19 : vector<128x32xf32>
    %21 = arith.addf %13, %20 : vector<128x32xf32>
    %22 = vector.extract_strided_slice %14 {offsets = [0, 1], sizes = [128, 1], strides = [1, 1]} : vector<128x4xf32> to vector<128x1xf32>
    %23 = vector.extract_strided_slice %15 {offsets = [1, 0], sizes = [1, 32], strides = [1, 1]} : vector<4x32xf32> to vector<1x32xf32>
    %24 = vector.broadcast %22 : vector<128x1xf32> to vector<128x32xf32>
    %25 = vector.broadcast %23 : vector<1x32xf32> to vector<128x32xf32>
    %26 = arith.mulf %24, %25 : vector<128x32xf32>
    %27 = arith.addf %21, %26 : vector<128x32xf32>
    %28 = vector.extract_strided_slice %14 {offsets = [0, 2], sizes = [128, 1], strides = [1, 1]} : vector<128x4xf32> to vector<128x1xf32>
    %29 = vector.extract_strided_slice %15 {offsets = [2, 0], sizes = [1, 32], strides = [1, 1]} : vector<4x32xf32> to vector<1x32xf32>
    %30 = vector.broadcast %28 : vector<128x1xf32> to vector<128x32xf32>
    %31 = vector.broadcast %29 : vector<1x32xf32> to vector<128x32xf32>
    %32 = arith.mulf %30, %31 : vector<128x32xf32>
    %33 = arith.addf %27, %32 : vector<128x32xf32>
    %34 = vector.extract_strided_slice %14 {offsets = [0, 3], sizes = [128, 1], strides = [1, 1]} : vector<128x4xf32> to vector<128x1xf32>
    %35 = vector.extract_strided_slice %15 {offsets = [3, 0], sizes = [1, 32], strides = [1, 1]} : vector<4x32xf32> to vector<1x32xf32>
    %36 = vector.broadcast %34 : vector<128x1xf32> to vector<128x32xf32>
    %37 = vector.broadcast %35 : vector<1x32xf32> to vector<128x32xf32>
    %38 = arith.mulf %36, %37 : vector<128x32xf32>
    %39 = arith.addf %33, %38 : vector<128x32xf32>
    %40 = vector.broadcast %1 : vector<1x32xf32> to vector<128x32xf32>
    %41 = arith.addf %39, %40 : vector<128x32xf32>
    %cst_16 = arith.constant 0.000000e+00 : f32
    %42 = vector.broadcast %cst_16 : f32 to vector<128x32xf32>
    %43 = arith.maximumf %41, %42 : vector<128x32xf32>
    %44 = vector.broadcast %2 : vector<1x32xf32> to vector<128x32xf32>
    %45 = arith.mulf %43, %44 : vector<128x32xf32>
    %cst_17 = arith.constant dense<0.000000e+00> : vector<128xf32>
    %46 = vector.multi_reduction <add>, %45, %cst_17 [1] : vector<128x32xf32> to vector<128xf32>
    %47 = vector.shape_cast %46 : vector<128xf32> to vector<128x1xf32>
    %48 = vector.broadcast %3 : vector<1x1xf32> to vector<128x1xf32>
    %49 = arith.addf %47, %48 : vector<128x1xf32>
    %c0_18 = arith.constant 0 : index
    %c0_19 = arith.constant 0 : index
    %50 = vector.load %arg7[%c0_18, %c0_19] : memref<128x1xf32, #tpu.memory_space<vmem>>, vector<128x1xf32>
    tpu.vector_store %arg7[%c0_18, %c0_19], %49 {strides = array<i32>} : memref<128x1xf32, #tpu.memory_space<vmem>>, vector<128x1xf32>,
    return
  }
  func.func @transform_0(%arg0: i32) -> (i32, i32) {
    %c0_i32 = arith.constant 0 : i32
    %c0_i32_0 = arith.constant 0 : i32
    return %arg0, %c0_i32 : i32, i32
  }
  func.func @transform_1(%arg0: i32) -> (i32, i32) {
    %c0_i32 = arith.constant 0 : i32
    %c0_i32_0 = arith.constant 0 : i32
    return %arg0, %c0_i32 : i32, i32
  }
  func.func @transform_2(%arg0: i32) -> (i32, i32) {
    %c0_i32 = arith.constant 0 : i32
    %c0_i32_0 = arith.constant 0 : i32
    %c0_i32_1 = arith.constant 0 : i32
    return %c0_i32, %c0_i32_0 : i32, i32
  }
  func.func @transform_3(%arg0: i32) -> (i32, i32) {
    %c0_i32 = arith.constant 0 : i32
    %c0_i32_0 = arith.constant 0 : i32
    %c0_i32_1 = arith.constant 0 : i32
    return %c0_i32, %c0_i32_0 : i32, i32
  }
  func.func @transform_4(%arg0: i32) -> (i32, i32) {
    %c0_i32 = arith.constant 0 : i32
    %c0_i32_0 = arith.constant 0 : i32
    %c0_i32_1 = arith.constant 0 : i32
    return %c0_i32, %c0_i32_0 : i32, i32
  }
  func.func @transform_5(%arg0: i32) -> (i32, i32) {
    %c0_i32 = arith.constant 0 : i32
    %c0_i32_0 = arith.constant 0 : i32
    %c0_i32_1 = arith.constant 0 : i32
    return %c0_i32, %c0_i32_0 : i32, i32
  }
  func.func @transform_6(%arg0: i32) -> (i32, i32) {
    %c0_i32 = arith.constant 0 : i32
    %c0_i32_0 = arith.constant 0 : i32
    return %arg0, %c0_i32 : i32, i32
  }
}

</mosaic_0001>

<llo_original>
// kernel: critic_forward.1
$region0: #{critic_forward.1}
  #allocation0 [shape = 'u32[]', space=smem, size = 0x4, offset = 0x4, fixed_abs, tag = 'smem constant byte address 0x4 - core index']
  #allocation1 [shape = 'u32[144,128]{1,0:T(1,128)}', space=vmem, size = 0x12000, scoped, tag = 'internal scratch']
  %s0 = inlined_call_operand.vmem [shape: bf16[256,16], index: 0, kind: input, shape index: {}]
  %s1 = inlined_call_operand.vmem [shape: f32[256,4], index: 1, kind: input, shape index: {}]
  %s2 = inlined_call_operand.vmem [shape: bf16[16,32], index: 2, kind: input, shape index: {}]
  %s3 = inlined_call_operand.vmem [shape: bf16[32,32], index: 3, kind: input, shape index: {}]
  %s4 = inlined_call_operand.vmem [shape: f32[4,32], index: 4, kind: input, shape index: {}]
  %s5 = inlined_call_operand.vmem [shape: f32[4,32], index: 5, kind: input, shape index: {}]
  %s6 = inlined_call_operand.vmem [shape: f32[256,1], index: 6, kind: output, shape index: {}]
  %s7 = sld [smem:[#allocation0]]
  $region57: #{critic_forward.1} parent=0
    _
  %s9 = ssub.s32 1, %s7
  %s10 = scalar_select 0, %s9, %s7
  loop: start=0, step=1, limit=4
  $region2: #{critic_forward.1} parent=0 // loop_pre_header
    _
  $region3: #{critic_forward.1} parent=0 // loop_header
    %s12 = sphi 0, %s16
    %p13 = scmp.ge.s32.totalorder %s12, 4
    %s22 = sphi 0, %s24
    %s25 = sphi 0, %s22
    %s26 = sphi 0, %s25
    %s42 = sphi 0, %s26
    %s48 = sphi 0, %s50
    %s51 = sphi 0, %s48
    %s52 = sphi 0, %s51
    %s68 = sphi 0, %s52
    %s72 = sphi 0, %s72
    %s74 = sphi 0, %s72
    %s75 = sphi 0, %s74
    %s89 = sphi 0, %s75
    %s93 = sphi 0, %s93
    %s95 = sphi 0, %s93
    %s96 = sphi 0, %s95
    %s110 = sphi 0, %s96
    %s114 = sphi 0, %s114
    %s116 = sphi 0, %s114
    %s117 = sphi 0, %s116
    %s131 = sphi 0, %s117
    %s135 = sphi 0, %s135
    %s137 = sphi 0, %s135
    %s138 = sphi 0, %s137
    %s152 = sphi 0, %s138
    %s158 = sphi 0, %s160
    %s161 = sphi 0, %s158
    %s162 = sphi 0, %s161
    %s178 = sphi 0, %s162
  $region4: #{critic_forward.1} parent=0 // loop_header_branch
    %15 = sbr.rel (%p13) target = $region8
  $region5: #{critic_forward.1} parent=0 // loop_body
    %s17 = ssub.s32 %s12, 1
    %s18 = ssub.s32 %s12, 2
    %s19 = sadd.s32 %s12, 1
    %s20 = ssub.s32 %s12, %s19
    %p21 = scmp.eq.s32.totalorder %s20, 0
    %s23 = sadd.s32 %s22, 1
    %s24 = scalar_select %p21, %s22, %s23
    %p27 = pneg %p21
    %p28 = scmp.eq.s32.totalorder %s12, 1
    %p29 = por %p27, %p28
    %p30 = scmp.ne.s32.totalorder %s22, %s25
    %p31 = scmp.eq.s32.totalorder %s12, 0
    %p32 = por %p30, %p31
    %p33 = scmp.ne.s32.totalorder %s22, %s25
    %p34 = scmp.eq.s32.totalorder %s17, 1
    %p35 = por %p33, %p34
    %p36 = scmp.ne.s32.totalorder %s25, %s26
    %p37 = scmp.eq.s32.totalorder %s17, 0
    %p38 = por %p36, %p37
    %p39 = scmp.ne.s32.totalorder %s25, %s26
    %p40 = scmp.eq.s32.totalorder %s18, 1
    %p41 = por %p39, %p40
    %p43 = scmp.ne.s32.totalorder %s26, %s42
    %p44 = scmp.eq.s32.totalorder %s18, 0
    %p45 = por %p43, %p44
    %s46 = ssub.s32 %s12, %s19
    %p47 = scmp.eq.s32.totalorder %s46, 0
    %s49 = sadd.s32 %s48, 1
    %s50 = scalar_select %p47, %s48, %s49
    %p53 = pneg %p47
    %p54 = scmp.eq.s32.totalorder %s12, 1
    %p55 = por %p53, %p54
    %p56 = scmp.ne.s32.totalorder %s48, %s51
    %p57 = scmp.eq.s32.totalorder %s12, 0
    %p58 = por %p56, %p57
    %p59 = scmp.ne.s32.totalorder %s48, %s51
    %p60 = scmp.eq.s32.totalorder %s17, 1
    %p61 = por %p59, %p60
    %p62 = scmp.ne.s32.totalorder %s51, %s52
    %p63 = scmp.eq.s32.totalorder %s17, 0
    %p64 = por %p62, %p63
    %p65 = scmp.ne.s32.totalorder %s51, %s52
    %p66 = scmp.eq.s32.totalorder %s18, 1
    %p67 = por %p65, %p66
    %p69 = scmp.ne.s32.totalorder %s52, %s68
    %p70 = scmp.eq.s32.totalorder %s18, 0
    %p71 = por %p69, %p70
    %s73 = sadd.s32 %s72, 1
    %p76 = scmp.eq.s32.totalorder %s12, 1
    %p77 = scmp.ne.s32.totalorder %s72, %s74
    %p78 = scmp.eq.s32.totalorder %s12, 0
    %p79 = por %p77, %p78
    %p80 = scmp.ne.s32.totalorder %s72, %s74
    %p81 = scmp.eq.s32.totalorder %s17, 1
    %p82 = por %p80, %p81
    %p83 = scmp.ne.s32.totalorder %s74, %s75
    %p84 = scmp.eq.s32.totalorder %s17, 0
    %p85 = por %p83, %p84
    %p86 = scmp.ne.s32.totalorder %s74, %s75
    %p87 = scmp.eq.s32.totalorder %s18, 1
    %p88 = por %p86, %p87
    %p90 = scmp.ne.s32.totalorder %s75, %s89
    %p91 = scmp.eq.s32.totalorder %s18, 0
    %p92 = por %p90, %p91
    %s94 = sadd.s32 %s93, 1
    %p97 = scmp.eq.s32.totalorder %s12, 1
    %p98 = scmp.ne.s32.totalorder %s93, %s95
    %p99 = scmp.eq.s32.totalorder %s12, 0
    %p100 = por %p98, %p99
    %p101 = scmp.ne.s32.totalorder %s93, %s95
    %p102 = scmp.eq.s32.totalorder %s17, 1
    %p103 = por %p101, %p102
    %p104 = scmp.ne.s32.totalorder %s95, %s96
    %p105 = scmp.eq.s32.totalorder %s17, 0
    %p106 = por %p104, %p105
    %p107 = scmp.ne.s32.totalorder %s95, %s96
    %p108 = scmp.eq.s32.totalorder %s18, 1
    %p109 = por %p107, %p108
    %p111 = scmp.ne.s32.totalorder %s96, %s110
    %p112 = scmp.eq.s32.totalorder %s18, 0
    %p113 = por %p111, %p112
    %s115 = sadd.s32 %s114, 1
    %p118 = scmp.eq.s32.totalorder %s12, 1
    %p119 = scmp.ne.s32.totalorder %s114, %s116
    %p120 = scmp.eq.s32.totalorder %s12, 0
    %p121 = por %p119, %p120
    %p122 = scmp.ne.s32.totalorder %s114, %s116
    %p123 = scmp.eq.s32.totalorder %s17, 1
    %p124 = por %p122, %p123
    %p125 = scmp.ne.s32.totalorder %s116, %s117
    %p126 = scmp.eq.s32.totalorder %s17, 0
    %p127 = por %p125, %p126
    %p128 = scmp.ne.s32.totalorder %s116, %s117
    %p129 = scmp.eq.s32.totalorder %s18, 1
    %p130 = por %p128, %p129
    %p132 = scmp.ne.s32.totalorder %s117, %s131
    %p133 = scmp.eq.s32.totalorder %s18, 0
    %p134 = por %p132, %p133
    %s136 = sadd.s32 %s135, 1
    %p139 = scmp.eq.s32.totalorder %s12, 1
    %p140 = scmp.ne.s32.totalorder %s135, %s137
    %p141 = scmp.eq.s32.totalorder %s12, 0
    %p142 = por %p140, %p141
    %p143 = scmp.ne.s32.totalorder %s135, %s137
    %p144 = scmp.eq.s32.totalorder %s17, 1
    %p145 = por %p143, %p144
    %p146 = scmp.ne.s32.totalorder %s137, %s138
    %p147 = scmp.eq.s32.totalorder %s17, 0
    %p148 = por %p146, %p147
    %p149 = scmp.ne.s32.totalorder %s137, %s138
    %p150 = scmp.eq.s32.totalorder %s18, 1
    %p151 = por %p149, %p150
    %p153 = scmp.ne.s32.totalorder %s138, %s152
    %p154 = scmp.eq.s32.totalorder %s18, 0
    %p155 = por %p153, %p154
    %s156 = ssub.s32 %s12, %s19
    %p157 = scmp.eq.s32.totalorder %s156, 0
    %s159 = sadd.s32 %s158, 1
    %s160 = scalar_select %p157, %s158, %s159
    %p163 = pneg %p157
    %p164 = scmp.eq.s32.totalorder %s12, 1
    %p165 = por %p163, %p164
    %p166 = scmp.ne.s32.totalorder %s158, %s161
    %p167 = scmp.eq.s32.totalorder %s12, 0
    %p168 = por %p166, %p167
    %p169 = scmp.ne.s32.totalorder %s158, %s161
    %p170 = scmp.eq.s32.totalorder %s17, 1
    %p171 = por %p169, %p170
    %p172 = scmp.ne.s32.totalorder %s161, %s162
    %p173 = scmp.eq.s32.totalorder %s17, 0
    %p174 = por %p172, %p173
    %p175 = scmp.ne.s32.totalorder %s161, %s162
    %p176 = scmp.eq.s32.totalorder %s18, 1
    %p177 = por %p175, %p176
    %p179 = scmp.ne.s32.totalorder %s162, %s178
    %p180 = scmp.eq.s32.totalorder %s18, 0
    %p181 = por %p179, %p180
    %p182 = scmp.le.s32.totalorder 1, %s12
    %p183 = scmp.lt.s32.totalorder %s12, 3
    %p184 = pnand %p182, %p183
    %p185 = pneg %p184
    // Predicated region
    $region9: #{critic_forward.1} parent=5 // pred_check
      _
    $region10: #{critic_forward.1} parent=5 // pred_check_branch
      %187 = sbr.rel (%p184) target = $region12
    $region11: #{critic_forward.1} parent=5 // pred_region
      %s188 = ssub.s32 %s12, 1
      // Predicated region
      $region13: #{critic_forward.1} parent=11 // pred_check
        %p189 = pneg %p85
      $region14: #{critic_forward.1} parent=11 // pred_check_branch
        %191 = sbr.rel (%p189) target = $region16
      $region15: #{critic_forward.1} parent=11 // pred_region
        _
      $region16: #{critic_forward.1} parent=11 // pred_fallthru
        _
      // Predicated region
      $region17: #{critic_forward.1} parent=11 // pred_check
        %p192 = pneg %p106
      $region18: #{critic_forward.1} parent=11 // pred_check_branch
        %194 = sbr.rel (%p192) target = $region20
      $region19: #{critic_forward.1} parent=11 // pred_region
        _
      $region20: #{critic_forward.1} parent=11 // pred_fallthru
        _
      // Predicated region
      $region21: #{critic_forward.1} parent=11 // pred_check
        %p195 = pneg %p127
      $region22: #{critic_forward.1} parent=11 // pred_check_branch
        %197 = sbr.rel (%p195) target = $region24
      $region23: #{critic_forward.1} parent=11 // pred_region
        _
      $region24: #{critic_forward.1} parent=11 // pred_fallthru
        _
      // Predicated region
      $region25: #{critic_forward.1} parent=11 // pred_check
        %p198 = pneg %p148
      $region26: #{critic_forward.1} parent=11 // pred_check_branch
        %200 = sbr.rel (%p198) target = $region28
      $region27: #{critic_forward.1} parent=11 // pred_region
        _
      $region28: #{critic_forward.1} parent=11 // pred_fallthru
        _
    $region12: #{critic_forward.1} parent=5 // pred_fallthru
      _
    %p201 = scmp.lt.s32.totalorder %s12, 2
    // Predicated region
    $region29: #{critic_forward.1} parent=5 // pred_check
      %p202 = pneg %p201
    $region30: #{critic_forward.1} parent=5 // pred_check_branch
      %204 = sbr.rel (%p202) target = $region32
    $region31: #{critic_forward.1} parent=5 // pred_region
      // Predicated region
      $region33: #{critic_forward.1} parent=31 // pred_check
        %p205 = pneg %p32
      $region34: #{critic_forward.1} parent=31 // pred_check_branch
        %207 = sbr.rel (%p205) target = $region36
      $region35: #{critic_forward.1} parent=31 // pred_region
        %s208 = smul.u32 16, %s12
        %p209 = scmp.lt.s32.totalorder %s208, 31
        %s210 = scalar_select %p209, %s208, 31
        %s211 = smul.addr %s210, 4
        %s212 = scalar_lea.vmem %s0, %s211
        %s213 = smul.u32 16, %s12
      $region36: #{critic_forward.1} parent=31 // pred_fallthru
        _
      // Predicated region
      $region37: #{critic_forward.1} parent=31 // pred_check
        %p214 = pneg %p58
      $region38: #{critic_forward.1} parent=31 // pred_check_branch
        %216 = sbr.rel (%p214) target = $region40
      $region39: #{critic_forward.1} parent=31 // pred_region
        %s217 = smul.u32 16, %s12
        %p218 = scmp.lt.s32.totalorder %s217, 31
        %s219 = scalar_select %p218, %s217, 31
        %s220 = smul.addr %s219, 8
        %s221 = scalar_lea.vmem %s1, %s220
        %s222 = smul.u32 16, %s12
      $region40: #{critic_forward.1} parent=31 // pred_fallthru
        _
    $region32: #{critic_forward.1} parent=5 // pred_fallthru
      _
    %p223 = scmp.le.s32.totalorder 1, %s12
    %p224 = scmp.lt.s32.totalorder %s12, 3
    %p225 = pnand %p223, %p224
    %p226 = pneg %p225
    // Predicated region
    $region41: #{critic_forward.1} parent=5 // pred_check
      _
    $region42: #{critic_forward.1} parent=5 // pred_check_branch
      %228 = sbr.rel (%p225) target = $region44
    $region43: #{critic_forward.1} parent=5 // pred_region
      %s229 = ssub.s32 %s12, 1
      %s230 = smul.u32 16, %s17
      %p231 = scmp.lt.s32.totalorder %s230, 31
      %s232 = scalar_select %p231, %s230, 31
      %s233 = smul.addr %s232, 4
      %s234 = scalar_lea.vmem %s0, %s233
      %p235 = pneg %p38
      %p236 = pneg %p35
      %s237 = smul.u32 16, %s17
      %p238 = scmp.lt.s32.totalorder %s237, 31
      %s239 = scalar_select %p238, %s237, 31
      %s240 = smul.addr %s239, 8
      %s241 = scalar_lea.vmem %s1, %s240
      %p242 = pneg %p64
      %p243 = pneg %p61
      %p244 = pneg %p85
      %p245 = pneg %p82
      %p246 = pneg %p106
      %p247 = pneg %p103
      %p248 = pneg %p127
      %p249 = pneg %p124
      %p250 = pneg %p148
      %p251 = pneg %p145
      %p252 = pneg %p174
      %p253 = pneg %p171
      %s254 = smul.u32 16, %s17
      %p255 = scmp.lt.s32.totalorder %s254, 31
      %s256 = scalar_select %p255, %s254, 31
      %s257 = smul.addr %s256, 8
      %s258 = scalar_lea.vmem %s6, %s257
      %s259 = smul.u32 16, %s17
      %p260 = scmp.lt.s32.totalorder %s259, 31
      %s261 = scalar_select %p260, %s259, 31
      %s262 = smul.addr %s261, 4
      %s263 = scalar_lea.vmem %s0, %s262
      %s264 = smul.u32 16, %s17
      %s265 = smul.u32 16, %s17
      %p266 = scmp.lt.s32.totalorder %s265, 31
      %s267 = scalar_select %p266, %s265, 31
      %s268 = smul.addr %s267, 8
      %s269 = scalar_lea.vmem %s1, %s268
      %s270 = smul.u32 16, %s17
      %s271 = smul.u32 16, %s17
      %p272 = scmp.lt.s32.totalorder %s271, 31
      %s273 = scalar_select %p272, %s271, 31
      %s274 = smul.addr %s273, 8
      %s275 = scalar_lea.vmem %s6, %s274
      %s276 = smul.u32 16, %s17
      %v278 = vld [vmem:[%s5] sm:$0x1]
      %v279 = vld [vmem:[%s5 + $0x1] sm:$0x1]
      %v280 = vld [vmem:[%s5 + $0x2] sm:$0x1]
      %v281 = vld [vmem:[%s5 + $0x3] sm:$0x1]
      %v282 = vld [vmem:[%s263] sm:$0xf]
      %v283 = vld [vmem:[%s263 + $0x4] sm:$0xf]
      %v284 = vld [vmem:[%s263 + $0x8] sm:$0xf]
      %v285 = vld [vmem:[%s263 + $0xc] sm:$0xf]
      %v286 = vld [vmem:[%s263 + $0x10] sm:$0xf]
      %v287 = vld [vmem:[%s263 + $0x14] sm:$0xf]
      %v288 = vld [vmem:[%s263 + $0x18] sm:$0xf]
      %v289 = vld [vmem:[%s263 + $0x1c] sm:$0xf]
      %v290 = vld [vmem:[%s263 + $0x20] sm:$0xf]
      %v291 = vld [vmem:[%s263 + $0x24] sm:$0xf]
      %v292 = vld [vmem:[%s263 + $0x28] sm:$0xf]
      %v293 = vld [vmem:[%s263 + $0x2c] sm:$0xf]
      %v294 = vld [vmem:[%s263 + $0x30] sm:$0xf]
      %v295 = vld [vmem:[%s263 + $0x34] sm:$0xf]
      %v296 = vld [vmem:[%s263 + $0x38] sm:$0xf]
      %v297 = vld [vmem:[%s263 + $0x3c] sm:$0xf]
      %v298 = vld [vmem:[%s2] sm:$0xf]
      %v299 = vld [vmem:[%s2 + $0x4] sm:$0xf]
      %v300 = vlaneseq
      %v301 = vshrl.u32 %v300, 7
      %v302 = vsub.s32 0, %v301
      %v303 = vrot.slane %v278, %v302
      %v320 = vunpack.c.l.b16 %v282
      %v321 = vunpack.c.l.b16 %v283
      %v322 = vunpack.c.l.b16 %v284
      %v323 = vunpack.c.l.b16 %v285
      %v324 = vunpack.c.l.b16 %v286
      %v325 = vunpack.c.l.b16 %v287
      %v326 = vunpack.c.l.b16 %v288
      %v327 = vunpack.c.l.b16 %v289
      %v328 = vunpack.c.l.b16 %v290
      %v329 = vunpack.c.l.b16 %v291
      %v330 = vunpack.c.l.b16 %v292
      %v331 = vunpack.c.l.b16 %v293
      %v332 = vunpack.c.l.b16 %v294
      %v333 = vunpack.c.l.b16 %v295
      %v334 = vunpack.c.l.b16 %v296
      %v335 = vunpack.c.l.b16 %v297
      %v336 = vpack.c.b16 %v321, %v320
      %v337 = vpack.c.b16 %v323, %v322
      %v338 = vpack.c.b16 %v325, %v324
      %v339 = vpack.c.b16 %v327, %v326
      %v340 = vpack.c.b16 %v329, %v328
      %v341 = vpack.c.b16 %v331, %v330
      %v342 = vpack.c.b16 %v333, %v332
      %v343 = vpack.c.b16 %v335, %v334
      %v346 = vunpack.c.l.b16 %v298
      %v347 = vunpack.c.l.b16 %v299
      %v348 = vpack.c.b16 %v347, %v346
      %vm350 = vcmask 130048
      %v352 = vsel %vm350, %v336, 0
      %v355 = vsel %vm350, %v337, 0
      %v358 = vsel %vm350, %v338, 0
      %v361 = vsel %vm350, %v339, 0
      %v364 = vsel %vm350, %v340, 0
      %v367 = vsel %vm350, %v341, 0
      %v370 = vsel %vm350, %v342, 0
      %v373 = vsel %vm350, %v343, 0
      %375 = vmatprep.subr.bf16.mxu0 0
      %376 = vmatpush1.bf16.msra.mxu0 %v348
      %377 = vmatprep.subr.bf16.mxu0 0
      %378 = vmatpush1.bf16.msra.mxu0 0
      %379 = vmatprep.subr.bf16.mxu0 0
      %380 = vmatpush1.bf16.msra.mxu0 0
      %381 = vmatprep.subr.bf16.mxu0 0
      %382 = vmatpush1.bf16.msra.mxu0 0
      %383 = vmatprep.subr.bf16.mxu0 0
      %384 = vmatpush1.bf16.msra.mxu0 0
      %385 = vmatprep.subr.bf16.mxu0 0
      %386 = vmatpush1.bf16.msra.mxu0 0
      %387 = vmatprep.subr.bf16.mxu0 0
      %388 = vmatpush1.bf16.msra.mxu0 0
      %389 = vmatprep.subr.bf16.mxu0 0
      %390 = vmatpush1.bf16.msra.mxu0 0
      %391 = vmatprep.subr.bf16.mxu0 0
      %392 = vmatpush1.bf16.msra.mxu0 0
      %393 = vmatprep.subr.bf16.mxu0 0
      %394 = vmatpush1.bf16.msra.mxu0 0
      %395 = vmatprep.subr.bf16.mxu0 0
      %396 = vmatpush1.bf16.msra.mxu0 0
      %397 = vmatprep.subr.bf16.mxu0 0
      %398 = vmatpush1.bf16.msra.mxu0 0
      %399 = vmatprep.subr.bf16.mxu0 0
      %400 = vmatpush1.bf16.msra.mxu0 0
      %401 = vmatprep.subr.bf16.mxu0 0
      %402 = vmatpush1.bf16.msra.mxu0 0
      %403 = vmatprep.subr.bf16.mxu0 0
      %404 = vmatpush1.bf16.msra.mxu0 0
      %405 = vmatprep.subr.bf16.mxu0 0
      %406 = vmatpush1.bf16.msra.mxu0 0
      %407 = vmatprep.mubr.bf16.mxu0 0
      %408 = vmatmul.mubr.bf16.gmra.mrb[0].mxu0 %v352
      %v409 = vpop.f32.mrb[0].mxu0
      %v410 = vadd.f32 %v303, %v409
      %v411 = vpop.f32.mrb[0].mxu0
      %v412 = vpop.f32.mrb[0].mxu0
      %v413 = vadd.f32 %v303, %v412
      %v414 = vpop.f32.mrb[0].mxu0
      %415 = vmatprep.mubr.bf16.mxu0 0
      %416 = vmatmul.mubr.bf16.gmra.mrb[0].mxu0 %v355
      %v417 = vpop.f32.mrb[0].mxu0
      %v418 = vadd.f32 %v303, %v417
      %v419 = vpop.f32.mrb[0].mxu0
      %v420 = vpop.f32.mrb[0].mxu0
      %v421 = vadd.f32 %v303, %v420
      %v422 = vpop.f32.mrb[0].mxu0
      %423 = vmatprep.mubr.bf16.mxu0 0
      %424 = vmatmul.mubr.bf16.gmra.mrb[0].mxu0 %v358
      %v425 = vpop.f32.mrb[0].mxu0
      %v426 = vadd.f32 %v303, %v425
      %v427 = vpop.f32.mrb[0].mxu0
      %v428 = vpop.f32.mrb[0].mxu0
      %v429 = vadd.f32 %v303, %v428
      %v430 = vpop.f32.mrb[0].mxu0
      %431 = vmatprep.mubr.bf16.mxu0 0
      %432 = vmatmul.mubr.bf16.gmra.mrb[0].mxu0 %v361
      %v433 = vpop.f32.mrb[0].mxu0
      %v434 = vadd.f32 %v303, %v433
      %v435 = vpop.f32.mrb[0].mxu0
      %v436 = vpop.f32.mrb[0].mxu0
      %v437 = vadd.f32 %v303, %v436
      %v438 = vpop.f32.mrb[0].mxu0
      %439 = vmatprep.mubr.bf16.mxu0 0
      %440 = vmatmul.mubr.bf16.gmra.mrb[0].mxu0 %v364
      %v441 = vpop.f32.mrb[0].mxu0
      %v442 = vadd.f32 %v303, %v441
      %v443 = vpop.f32.mrb[0].mxu0
      %v444 = vpop.f32.mrb[0].mxu0
      %v445 = vadd.f32 %v303, %v444
      %v446 = vpop.f32.mrb[0].mxu0
      %447 = vmatprep.mubr.bf16.mxu0 0
      %448 = vmatmul.mubr.bf16.gmra.mrb[0].mxu0 %v367
      %v449 = vpop.f32.mrb[0].mxu0
      %v450 = vadd.f32 %v303, %v449
      %v451 = vpop.f32.mrb[0].mxu0
      %v452 = vpop.f32.mrb[0].mxu0
      %v453 = vadd.f32 %v303, %v452
      %v454 = vpop.f32.mrb[0].mxu0
      %455 = vmatprep.mubr.bf16.mxu0 0
      %456 = vmatmul.mubr.bf16.gmra.mrb[0].mxu0 %v370
      %v457 = vpop.f32.mrb[0].mxu0
      %v458 = vadd.f32 %v303, %v457
      %v459 = vpop.f32.mrb[0].mxu0
      %v460 = vpop.f32.mrb[0].mxu0
      %v461 = vadd.f32 %v303, %v460
      %v462 = vpop.f32.mrb[0].mxu0
      %463 = vmatprep.mubr.bf16.mxu0 0
      %464 = vmatmul.mubr.bf16.gmra.mrb[0].mxu0 %v373
      %v465 = vpop.f32.mrb[0].mxu0
      %v466 = vadd.f32 %v303, %v465
      %v467 = vpop.f32.mrb[0].mxu0
      %v468 = vpop.f32.mrb[0].mxu0
      %v469 = vadd.f32 %v303, %v468
      %v470 = vpop.f32.mrb[0].mxu0
      %471 = vdwg.mxu0
      %v472 = vmax.f32 %v410, 0.0
      %v473 = vmax.f32 %v413, 0.0
      %v474 = vmax.f32 %v418, 0.0
      %v475 = vmax.f32 %v421, 0.0
      %v476 = vmax.f32 %v426, 0.0
      %v477 = vmax.f32 %v429, 0.0
      %v478 = vmax.f32 %v434, 0.0
      %v479 = vmax.f32 %v437, 0.0
      %v480 = vmax.f32 %v442, 0.0
      %v481 = vmax.f32 %v445, 0.0
      %v482 = vmax.f32 %v450, 0.0
      %v483 = vmax.f32 %v453, 0.0
      %v484 = vmax.f32 %v458, 0.0
      %v485 = vmax.f32 %v461, 0.0
      %v486 = vmax.f32 %v466, 0.0
      %v487 = vmax.f32 %v469, 0.0
      %v488 = vpack.c.bf16 %v473, %v472
      %v489 = vpack.c.bf16 %v475, %v474
      %v490 = vpack.c.bf16 %v477, %v476
      %v491 = vpack.c.bf16 %v479, %v478
      %v492 = vpack.c.bf16 %v481, %v480
      %v493 = vpack.c.bf16 %v483, %v482
      %v494 = vpack.c.bf16 %v485, %v484
      %v495 = vpack.c.bf16 %v487, %v486
      %v496 = vld [vmem:[%s3] sm:$0xf]
      %v497 = vld [vmem:[%s3 + $0x4] sm:$0xf]
      %v498 = vld [vmem:[%s3 + $0x8] sm:$0xf]
      %v499 = vld [vmem:[%s3 + $0xc] sm:$0xf]
      %v500 = vld [vmem:[%s269] sm:$0xff]
      %v501 = vld [vmem:[%s269 + $0x8] sm:$0xff]
      %v502 = vld [vmem:[%s269 + $0x10] sm:$0xff]
      %v503 = vld [vmem:[%s269 + $0x18] sm:$0xff]
      %v504 = vld [vmem:[%s269 + $0x20] sm:$0xff]
      %v505 = vld [vmem:[%s269 + $0x28] sm:$0xff]
      %v506 = vld [vmem:[%s269 + $0x30] sm:$0xff]
      %v507 = vld [vmem:[%s269 + $0x38] sm:$0xff]
      %v508 = vld [vmem:[%s269 + $0x40] sm:$0xff]
      %v509 = vld [vmem:[%s269 + $0x48] sm:$0xff]
      %v510 = vld [vmem:[%s269 + $0x50] sm:$0xff]
      %v511 = vld [vmem:[%s269 + $0x58] sm:$0xff]
      %v512 = vld [vmem:[%s269 + $0x60] sm:$0xff]
      %v513 = vld [vmem:[%s269 + $0x68] sm:$0xff]
      %v514 = vld [vmem:[%s269 + $0x70] sm:$0xff]
      %v515 = vld [vmem:[%s269 + $0x78] sm:$0xff]
      %v516 = vld [vmem:[%s4] sm:$0xf]
      %518 = vset.pattern.permute.xlu0 0
      %519 = vperm.xlu0 %518, %v500
      %v520 = vpop.permute.xlu0 %519
      %523 = vset.pattern.permute.xlu0 0
      %524 = vperm.xlu0 %523, %v501
      %v525 = vpop.permute.xlu0 %524
      %528 = vset.pattern.permute.xlu0 0
      %529 = vperm.xlu0 %528, %v502
      %v530 = vpop.permute.xlu0 %529
      %533 = vset.pattern.permute.xlu0 0
      %534 = vperm.xlu0 %533, %v503
      %v535 = vpop.permute.xlu0 %534
      %538 = vset.pattern.permute.xlu0 0
      %539 = vperm.xlu0 %538, %v504
      %v540 = vpop.permute.xlu0 %539
      %543 = vset.pattern.permute.xlu0 0
      %544 = vperm.xlu0 %543, %v505
      %v545 = vpop.permute.xlu0 %544
      %548 = vset.pattern.permute.xlu0 0
      %549 = vperm.xlu0 %548, %v506
      %v550 = vpop.permute.xlu0 %549
      %553 = vset.pattern.permute.xlu0 0
      %554 = vperm.xlu0 %553, %v507
      %v555 = vpop.permute.xlu0 %554
      %558 = vset.pattern.permute.xlu0 0
      %559 = vperm.xlu0 %558, %v508
      %v560 = vpop.permute.xlu0 %559
      %563 = vset.pattern.permute.xlu0 0
      %564 = vperm.xlu0 %563, %v509
      %v565 = vpop.permute.xlu0 %564
      %568 = vset.pattern.permute.xlu0 0
      %569 = vperm.xlu0 %568, %v510
      %v570 = vpop.permute.xlu0 %569
      %573 = vset.pattern.permute.xlu0 0
      %574 = vperm.xlu0 %573, %v511
      %v575 = vpop.permute.xlu0 %574
      %578 = vset.pattern.permute.xlu0 0
      %579 = vperm.xlu0 %578, %v512
      %v580 = vpop.permute.xlu0 %579
      %583 = vset.pattern.permute.xlu0 0
      %584 = vperm.xlu0 %583, %v513
      %v585 = vpop.permute.xlu0 %584
      %588 = vset.pattern.permute.xlu0 0
      %589 = vperm.xlu0 %588, %v514
      %v590 = vpop.permute.xlu0 %589
      %593 = vset.pattern.permute.xlu0 0
      %594 = vperm.xlu0 %593, %v515
      %v595 = vpop.permute.xlu0 %594
      %v597 = vlaneseq
      %v598 = vshrl.u32 %v597, 7
      %v599 = vsub.s32 0, %v598
      %v600 = vrot.slane %v516, %v599
      %v601 = vmul.f32 %v520, %v600
      %v602 = vmul.f32 %v525, %v600
      %v603 = vmul.f32 %v530, %v600
      %v604 = vmul.f32 %v535, %v600
      %v605 = vmul.f32 %v540, %v600
      %v606 = vmul.f32 %v545, %v600
      %v607 = vmul.f32 %v550, %v600
      %v608 = vmul.f32 %v555, %v600
      %v609 = vmul.f32 %v560, %v600
      %v610 = vmul.f32 %v565, %v600
      %v611 = vmul.f32 %v570, %v600
      %v612 = vmul.f32 %v575, %v600
      %v613 = vmul.f32 %v580, %v600
      %v614 = vmul.f32 %v585, %v600
      %v615 = vmul.f32 %v590, %v600
      %v616 = vmul.f32 %v595, %v600
      %v621 = vunpack.c.l.b16 %v496
      %v622 = vunpack.c.l.b16 %v497
      %v623 = vunpack.c.l.b16 %v498
      %v624 = vunpack.c.l.b16 %v499
      %v625 = vpack.c.b16 %v622, %v621
      %v626 = vpack.c.b16 %v624, %v623
      %vm629 = vcmask 261120
      %v631 = vsel %vm629, %v488, 0
      %v634 = vsel %vm629, %v489, 0
      %v637 = vsel %vm629, %v490, 0
      %v640 = vsel %vm629, %v491, 0
      %v643 = vsel %vm629, %v492, 0
      %v646 = vsel %vm629, %v493, 0
      %v649 = vsel %vm629, %v494, 0
      %v652 = vsel %vm629, %v495, 0
      %654 = vmatprep.subr.bf16.mxu0 0
      %655 = vmatpush1.bf16.msra.mxu0 %v625
      %656 = vmatprep.subr.bf16.mxu0 0
      %657 = vmatpush1.bf16.msra.mxu0 %v626
      %658 = vmatprep.subr.bf16.mxu0 0
      %659 = vmatpush1.bf16.msra.mxu0 0
      %660 = vmatprep.subr.bf16.mxu0 0
      %661 = vmatpush1.bf16.msra.mxu0 0
      %662 = vmatprep.subr.bf16.mxu0 0
      %663 = vmatpush1.bf16.msra.mxu0 0
      %664 = vmatprep.subr.bf16.mxu0 0
      %665 = vmatpush1.bf16.msra.mxu0 0
      %666 = vmatprep.subr.bf16.mxu0 0
      %667 = vmatpush1.bf16.msra.mxu0 0
      %668 = vmatprep.subr.bf16.mxu0 0
      %669 = vmatpush1.bf16.msra.mxu0 0
      %670 = vmatprep.subr.bf16.mxu0 0
      %671 = vmatpush1.bf16.msra.mxu0 0
      %672 = vmatprep.subr.bf16.mxu0 0
      %673 = vmatpush1.bf16.msra.mxu0 0
      %674 = vmatprep.subr.bf16.mxu0 0
      %675 = vmatpush1.bf16.msra.mxu0 0
      %676 = vmatprep.subr.bf16.mxu0 0
      %677 = vmatpush1.bf16.msra.mxu0 0
      %678 = vmatprep.subr.bf16.mxu0 0
      %679 = vmatpush1.bf16.msra.mxu0 0
      %680 = vmatprep.subr.bf16.mxu0 0
      %681 = vmatpush1.bf16.msra.mxu0 0
      %682 = vmatprep.subr.bf16.mxu0 0
      %683 = vmatpush1.bf16.msra.mxu0 0
      %684 = vmatprep.subr.bf16.mxu0 0
      %685 = vmatpush1.bf16.msra.mxu0 0
      %686 = vmatprep.mubr.bf16.mxu0 0
      %687 = vmatmul.mubr.bf16.gmra.mrb[0].mxu0 %v631
      %v688 = vpop.f32.mrb[0].mxu0
      %v689 = vadd.f32 %v601, %v688
      %v690 = vpop.f32.mrb[0].mxu0
      %v691 = vpop.f32.mrb[0].mxu0
      %v692 = vadd.f32 %v602, %v691
      %v693 = vpop.f32.mrb[0].mxu0
      %694 = vmatprep.mubr.bf16.mxu0 0
      %695 = vmatmul.mubr.bf16.gmra.mrb[0].mxu0 %v634
      %v696 = vpop.f32.mrb[0].mxu0
      %v697 = vadd.f32 %v603, %v696
      %v698 = vpop.f32.mrb[0].mxu0
      %v699 = vpop.f32.mrb[0].mxu0
      %v700 = vadd.f32 %v604, %v699
      %v701 = vpop.f32.mrb[0].mxu0
      %702 = vmatprep.mubr.bf16.mxu0 0
      %703 = vmatmul.mubr.bf16.gmra.mrb[0].mxu0 %v637
      %v704 = vpop.f32.mrb[0].mxu0
      %v705 = vadd.f32 %v605, %v704
      %v706 = vpop.f32.mrb[0].mxu0
      %v707 = vpop.f32.mrb[0].mxu0
      %v708 = vadd.f32 %v606, %v707
      %v709 = vpop.f32.mrb[0].mxu0
      %710 = vmatprep.mubr.bf16.mxu0 0
      %711 = vmatmul.mubr.bf16.gmra.mrb[0].mxu0 %v640
      %v712 = vpop.f32.mrb[0].mxu0
      %v713 = vadd.f32 %v607, %v712
      %v714 = vpop.f32.mrb[0].mxu0
      %v715 = vpop.f32.mrb[0].mxu0
      %v716 = vadd.f32 %v608, %v715
      %v717 = vpop.f32.mrb[0].mxu0
      %718 = vmatprep.mubr.bf16.mxu0 0
      %719 = vmatmul.mubr.bf16.gmra.mrb[0].mxu0 %v643
      %v720 = vpop.f32.mrb[0].mxu0
      %v721 = vadd.f32 %v609, %v720
      %v722 = vpop.f32.mrb[0].mxu0
      %v723 = vpop.f32.mrb[0].mxu0
      %v724 = vadd.f32 %v610, %v723
      %v725 = vpop.f32.mrb[0].mxu0
      %726 = vmatprep.mubr.bf16.mxu0 0
      %727 = vmatmul.mubr.bf16.gmra.mrb[0].mxu0 %v646
      %v728 = vpop.f32.mrb[0].mxu0
      %v729 = vadd.f32 %v611, %v728
      %v730 = vpop.f32.mrb[0].mxu0
      %v731 = vpop.f32.mrb[0].mxu0
      %v732 = vadd.f32 %v612, %v731
      %v733 = vpop.f32.mrb[0].mxu0
      %734 = vmatprep.mubr.bf16.mxu0 0
      %735 = vmatmul.mubr.bf16.gmra.mrb[0].mxu0 %v649
      %v736 = vpop.f32.mrb[0].mxu0
      %v737 = vadd.f32 %v613, %v736
      %v738 = vpop.f32.mrb[0].mxu0
      %v739 = vpop.f32.mrb[0].mxu0
      %v740 = vadd.f32 %v614, %v739
      %v741 = vpop.f32.mrb[0].mxu0
      %742 = vmatprep.mubr.bf16.mxu0 0
      %743 = vmatmul.mubr.bf16.gmra.mrb[0].mxu0 %v652
      %v744 = vpop.f32.mrb[0].mxu0
      %v745 = vadd.f32 %v615, %v744
      %v746 = vpop.f32.mrb[0].mxu0
      %v747 = vpop.f32.mrb[0].mxu0
      %v748 = vadd.f32 %v616, %v747
      %v749 = vpop.f32.mrb[0].mxu0
      %750 = vdwg.mxu0
      %751 = vset.pattern.permute.xlu0 1
      %752 = vperm.xlu0 %751, %v500
      %v753 = vpop.permute.xlu0 %752
      %755 = vset.pattern.permute.xlu0 1
      %756 = vperm.xlu0 %755, %v501
      %v757 = vpop.permute.xlu0 %756
      %759 = vset.pattern.permute.xlu0 1
      %760 = vperm.xlu0 %759, %v502
      %v761 = vpop.permute.xlu0 %760
      %763 = vset.pattern.permute.xlu0 1
      %764 = vperm.xlu0 %763, %v503
      %v765 = vpop.permute.xlu0 %764
      %767 = vset.pattern.permute.xlu0 1
      %768 = vperm.xlu0 %767, %v504
      %v769 = vpop.permute.xlu0 %768
      %771 = vset.pattern.permute.xlu0 1
      %772 = vperm.xlu0 %771, %v505
      %v773 = vpop.permute.xlu0 %772
      %775 = vset.pattern.permute.xlu0 1
      %776 = vperm.xlu0 %775, %v506
      %v777 = vpop.permute.xlu0 %776
      %779 = vset.pattern.permute.xlu0 1
      %780 = vperm.xlu0 %779, %v507
      %v781 = vpop.permute.xlu0 %780
      %783 = vset.pattern.permute.xlu0 1
      %784 = vperm.xlu0 %783, %v508
      %v785 = vpop.permute.xlu0 %784
      %787 = vset.pattern.permute.xlu0 1
      %788 = vperm.xlu0 %787, %v509
      %v789 = vpop.permute.xlu0 %788
      %791 = vset.pattern.permute.xlu0 1
      %792 = vperm.xlu0 %791, %v510
      %v793 = vpop.permute.xlu0 %792
      %795 = vset.pattern.permute.xlu0 1
      %796 = vperm.xlu0 %795, %v511
      %v797 = vpop.permute.xlu0 %796
      %799 = vset.pattern.permute.xlu0 1
      %800 = vperm.xlu0 %799, %v512
      %v801 = vpop.permute.xlu0 %800
      %803 = vset.pattern.permute.xlu0 1
      %804 = vperm.xlu0 %803, %v513
      %v805 = vpop.permute.xlu0 %804
      %807 = vset.pattern.permute.xlu0 1
      %808 = vperm.xlu0 %807, %v514
      %v809 = vpop.permute.xlu0 %808
      %811 = vset.pattern.permute.xlu0 1
      %812 = vperm.xlu0 %811, %v515
      %v813 = vpop.permute.xlu0 %812
      %v815 = vlaneseq
      %v816 = vshrl.u32 %v815, 7
      %v817 = vsub.s32 1, %v816
      %v818 = vrot.slane %v516, %v817
      %v819 = vmul.f32 %v753, %v818
      %v820 = vmul.f32 %v757, %v818
      %v821 = vmul.f32 %v761, %v818
      %v822 = vmul.f32 %v765, %v818
      %v823 = vmul.f32 %v769, %v818
      %v824 = vmul.f32 %v773, %v818
      %v825 = vmul.f32 %v777, %v818
      %v826 = vmul.f32 %v781, %v818
      %v827 = vmul.f32 %v785, %v818
      %v828 = vmul.f32 %v789, %v818
      %v829 = vmul.f32 %v793, %v818
      %v830 = vmul.f32 %v797, %v818
      %v831 = vmul.f32 %v801, %v818
      %v832 = vmul.f32 %v805, %v818
      %v833 = vmul.f32 %v809, %v818
      %v834 = vmul.f32 %v813, %v818
      %v835 = vadd.f32 %v689, %v819
      %v836 = vadd.f32 %v692, %v820
      %v837 = vadd.f32 %v697, %v821
      %v838 = vadd.f32 %v700, %v822
      %v839 = vadd.f32 %v705, %v823
      %v840 = vadd.f32 %v708, %v824
      %v841 = vadd.f32 %v713, %v825
      %v842 = vadd.f32 %v716, %v826
      %v843 = vadd.f32 %v721, %v827
      %v844 = vadd.f32 %v724, %v828
      %v845 = vadd.f32 %v729, %v829
      %v846 = vadd.f32 %v732, %v830
      %v847 = vadd.f32 %v737, %v831
      %v848 = vadd.f32 %v740, %v832
      %v849 = vadd.f32 %v745, %v833
      %v850 = vadd.f32 %v748, %v834
      %851 = vset.pattern.permute.xlu0 2
      %852 = vperm.xlu0 %851, %v500
      %v853 = vpop.permute.xlu0 %852
      %855 = vset.pattern.permute.xlu0 2
      %856 = vperm.xlu0 %855, %v501
      %v857 = vpop.permute.xlu0 %856
      %859 = vset.pattern.permute.xlu0 2
      %860 = vperm.xlu0 %859, %v502
      %v861 = vpop.permute.xlu0 %860
      %863 = vset.pattern.permute.xlu0 2
      %864 = vperm.xlu0 %863, %v503
      %v865 = vpop.permute.xlu0 %864
      %867 = vset.pattern.permute.xlu0 2
      %868 = vperm.xlu0 %867, %v504
      %v869 = vpop.permute.xlu0 %868
      %871 = vset.pattern.permute.xlu0 2
      %872 = vperm.xlu0 %871, %v505
      %v873 = vpop.permute.xlu0 %872
      %875 = vset.pattern.permute.xlu0 2
      %876 = vperm.xlu0 %875, %v506
      %v877 = vpop.permute.xlu0 %876
      %879 = vset.pattern.permute.xlu0 2
      %880 = vperm.xlu0 %879, %v507
      %v881 = vpop.permute.xlu0 %880
      %883 = vset.pattern.permute.xlu0 2
      %884 = vperm.xlu0 %883, %v508
      %v885 = vpop.permute.xlu0 %884
      %887 = vset.pattern.permute.xlu0 2
      %888 = vperm.xlu0 %887, %v509
      %v889 = vpop.permute.xlu0 %888
      %891 = vset.pattern.permute.xlu0 2
      %892 = vperm.xlu0 %891, %v510
      %v893 = vpop.permute.xlu0 %892
      %895 = vset.pattern.permute.xlu0 2
      %896 = vperm.xlu0 %895, %v511
      %v897 = vpop.permute.xlu0 %896
      %899 = vset.pattern.permute.xlu0 2
      %900 = vperm.xlu0 %899, %v512
      %v901 = vpop.permute.xlu0 %900
      %903 = vset.pattern.permute.xlu0 2
      %904 = vperm.xlu0 %903, %v513
      %v905 = vpop.permute.xlu0 %904
      %907 = vset.pattern.permute.xlu0 2
      %908 = vperm.xlu0 %907, %v514
      %v909 = vpop.permute.xlu0 %908
      %911 = vset.pattern.permute.xlu0 2
      %912 = vperm.xlu0 %911, %v515
      %v913 = vpop.permute.xlu0 %912
      %v915 = vlaneseq
      %v916 = vshrl.u32 %v915, 7
      %v917 = vsub.s32 2, %v916
      %v918 = vrot.slane %v516, %v917
      %v919 = vmul.f32 %v853, %v918
      %v920 = vmul.f32 %v857, %v918
      %v921 = vmul.f32 %v861, %v918
      %v922 = vmul.f32 %v865, %v918
      %v923 = vmul.f32 %v869, %v918
      %v924 = vmul.f32 %v873, %v918
      %v925 = vmul.f32 %v877, %v918
      %v926 = vmul.f32 %v881, %v918
      %v927 = vmul.f32 %v885, %v918
      %v928 = vmul.f32 %v889, %v918
      %v929 = vmul.f32 %v893, %v918
      %v930 = vmul.f32 %v897, %v918
      %v931 = vmul.f32 %v901, %v918
      %v932 = vmul.f32 %v905, %v918
      %v933 = vmul.f32 %v909, %v918
      %v934 = vmul.f32 %v913, %v918
      %v935 = vadd.f32 %v835, %v919
      %v936 = vadd.f32 %v836, %v920
      %v937 = vadd.f32 %v837, %v921
      %v938 = vadd.f32 %v838, %v922
      %v939 = vadd.f32 %v839, %v923
      %v940 = vadd.f32 %v840, %v924
      %v941 = vadd.f32 %v841, %v925
      %v942 = vadd.f32 %v842, %v926
      %v943 = vadd.f32 %v843, %v927
      %v944 = vadd.f32 %v844, %v928
      %v945 = vadd.f32 %v845, %v929
      %v946 = vadd.f32 %v846, %v930
      %v947 = vadd.f32 %v847, %v931
      %v948 = vadd.f32 %v848, %v932
      %v949 = vadd.f32 %v849, %v933
      %v950 = vadd.f32 %v850, %v934
      %951 = vset.pattern.permute.xlu0 3
      %952 = vperm.xlu0 %951, %v500
      %v953 = vpop.permute.xlu0 %952
      %955 = vset.pattern.permute.xlu0 3
      %956 = vperm.xlu0 %955, %v501
      %v957 = vpop.permute.xlu0 %956
      %959 = vset.pattern.permute.xlu0 3
      %960 = vperm.xlu0 %959, %v502
      %v961 = vpop.permute.xlu0 %960
      %963 = vset.pattern.permute.xlu0 3
      %964 = vperm.xlu0 %963, %v503
      %v965 = vpop.permute.xlu0 %964
      %967 = vset.pattern.permute.xlu0 3
      %968 = vperm.xlu0 %967, %v504
      %v969 = vpop.permute.xlu0 %968
      %971 = vset.pattern.permute.xlu0 3
      %972 = vperm.xlu0 %971, %v505
      %v973 = vpop.permute.xlu0 %972
      %975 = vset.pattern.permute.xlu0 3
      %976 = vperm.xlu0 %975, %v506
      %v977 = vpop.permute.xlu0 %976
      %979 = vset.pattern.permute.xlu0 3
      %980 = vperm.xlu0 %979, %v507
      %v981 = vpop.permute.xlu0 %980
      %983 = vset.pattern.permute.xlu0 3
      %984 = vperm.xlu0 %983, %v508
      %v985 = vpop.permute.xlu0 %984
      %987 = vset.pattern.permute.xlu0 3
      %988 = vperm.xlu0 %987, %v509
      %v989 = vpop.permute.xlu0 %988
      %991 = vset.pattern.permute.xlu0 3
      %992 = vperm.xlu0 %991, %v510
      %v993 = vpop.permute.xlu0 %992
      %995 = vset.pattern.permute.xlu0 3
      %996 = vperm.xlu0 %995, %v511
      %v997 = vpop.permute.xlu0 %996
      %999 = vset.pattern.permute.xlu0 3
      %1000 = vperm.xlu0 %999, %v512
      %v1001 = vpop.permute.xlu0 %1000
      %1003 = vset.pattern.permute.xlu0 3
      %1004 = vperm.xlu0 %1003, %v513
      %v1005 = vpop.permute.xlu0 %1004
      %1007 = vset.pattern.permute.xlu0 3
      %1008 = vperm.xlu0 %1007, %v514
      %v1009 = vpop.permute.xlu0 %1008
      %1011 = vset.pattern.permute.xlu0 3
      %1012 = vperm.xlu0 %1011, %v515
      %v1013 = vpop.permute.xlu0 %1012
      %v1015 = vlaneseq
      %v1016 = vshrl.u32 %v1015, 7
      %v1017 = vsub.s32 3, %v1016
      %v1018 = vrot.slane %v516, %v1017
      %v1019 = vmul.f32 %v953, %v1018
      %v1020 = vmul.f32 %v957, %v1018
      %v1021 = vmul.f32 %v961, %v1018
      %v1022 = vmul.f32 %v965, %v1018
      %v1023 = vmul.f32 %v969, %v1018
      %v1024 = vmul.f32 %v973, %v1018
      %v1025 = vmul.f32 %v977, %v1018
      %v1026 = vmul.f32 %v981, %v1018
      %v1027 = vmul.f32 %v985, %v1018
      %v1028 = vmul.f32 %v989, %v1018
      %v1029 = vmul.f32 %v993, %v1018
      %v1030 = vmul.f32 %v997, %v1018
      %v1031 = vmul.f32 %v1001, %v1018
      %v1032 = vmul.f32 %v1005, %v1018
      %v1033 = vmul.f32 %v1009, %v1018
      %v1034 = vmul.f32 %v1013, %v1018
      %v1035 = vadd.f32 %v935, %v1019
      %v1036 = vadd.f32 %v936, %v1020
      %v1037 = vadd.f32 %v937, %v1021
      %v1038 = vadd.f32 %v938, %v1022
      %v1039 = vadd.f32 %v939, %v1023
      %v1040 = vadd.f32 %v940, %v1024
      %v1041 = vadd.f32 %v941, %v1025
      %v1042 = vadd.f32 %v942, %v1026
      %v1043 = vadd.f32 %v943, %v1027
      %v1044 = vadd.f32 %v944, %v1028
      %v1045 = vadd.f32 %v945, %v1029
      %v1046 = vadd.f32 %v946, %v1030
      %v1047 = vadd.f32 %v947, %v1031
      %v1048 = vadd.f32 %v948, %v1032
      %v1049 = vadd.f32 %v949, %v1033
      %v1050 = vadd.f32 %v950, %v1034
      %v1051 = vlaneseq
      %v1052 = vshrl.u32 %v1051, 7
      %v1053 = vsub.s32 0, %v1052
      %v1054 = vrot.slane %v279, %v1053
      %v1055 = vadd.f32 %v1035, %v1054
      %v1056 = vadd.f32 %v1036, %v1054
      %v1057 = vadd.f32 %v1037, %v1054
      %v1058 = vadd.f32 %v1038, %v1054
      %v1059 = vadd.f32 %v1039, %v1054
      %v1060 = vadd.f32 %v1040, %v1054
      %v1061 = vadd.f32 %v1041, %v1054
      %v1062 = vadd.f32 %v1042, %v1054
      %v1063 = vadd.f32 %v1043, %v1054
      %v1064 = vadd.f32 %v1044, %v1054
      %v1065 = vadd.f32 %v1045, %v1054
      %v1066 = vadd.f32 %v1046, %v1054
      %v1067 = vadd.f32 %v1047, %v1054
      %v1068 = vadd.f32 %v1048, %v1054
      %v1069 = vadd.f32 %v1049, %v1054
      %v1070 = vadd.f32 %v1050, %v1054
      %v1071 = vmax.f32 %v1055, 0.0
      %v1072 = vmax.f32 %v1056, 0.0
      %v1073 = vmax.f32 %v1057, 0.0
      %v1074 = vmax.f32 %v1058, 0.0
      %v1075 = vmax.f32 %v1059, 0.0
      %v1076 = vmax.f32 %v1060, 0.0
      %v1077 = vmax.f32 %v1061, 0.0
      %v1078 = vmax.f32 %v1062, 0.0
      %v1079 = vmax.f32 %v1063, 0.0
      %v1080 = vmax.f32 %v1064, 0.0
      %v1081 = vmax.f32 %v1065, 0.0
      %v1082 = vmax.f32 %v1066, 0.0
      %v1083 = vmax.f32 %v1067, 0.0
      %v1084 = vmax.f32 %v1068, 0.0
      %v1085 = vmax.f32 %v1069, 0.0
      %v1086 = vmax.f32 %v1070, 0.0
      %v1087 = vlaneseq
      %v1088 = vshrl.u32 %v1087, 7
      %v1089 = vsub.s32 0, %v1088
      %v1090 = vrot.slane %v280, %v1089
      %v1091 = vmul.f32 %v1071, %v1090
      %v1092 = vmul.f32 %v1072, %v1090
      %v1093 = vmul.f32 %v1073, %v1090
      %v1094 = vmul.f32 %v1074, %v1090
      %v1095 = vmul.f32 %v1075, %v1090
      %v1096 = vmul.f32 %v1076, %v1090
      %v1097 = vmul.f32 %v1077, %v1090
      %v1098 = vmul.f32 %v1078, %v1090
      %v1099 = vmul.f32 %v1079, %v1090
      %v1100 = vmul.f32 %v1080, %v1090
      %v1101 = vmul.f32 %v1081, %v1090
      %v1102 = vmul.f32 %v1082, %v1090
      %v1103 = vmul.f32 %v1083, %v1090
      %v1104 = vmul.f32 %v1084, %v1090
      %v1105 = vmul.f32 %v1085, %v1090
      %v1106 = vmul.f32 %v1086, %v1090
      %v1107 = vsel %vm629, %v1091, 0.0
      %1108 = vadd.xlane.f32.xlu0 %v1107
      %v1109 = vpop.xlane.xlu0 %1108
      %v1110 = vsel %vm629, %v1092, 0.0
      %1111 = vadd.xlane.f32.xlu0 %v1110
      %v1112 = vpop.xlane.xlu0 %1111
      %v1113 = vsel %vm629, %v1093, 0.0
      %1114 = vadd.xlane.f32.xlu0 %v1113
      %v1115 = vpop.xlane.xlu0 %1114
      %v1116 = vsel %vm629, %v1094, 0.0
      %1117 = vadd.xlane.f32.xlu0 %v1116
      %v1118 = vpop.xlane.xlu0 %1117
      %v1119 = vsel %vm629, %v1095, 0.0
      %1120 = vadd.xlane.f32.xlu0 %v1119
      %v1121 = vpop.xlane.xlu0 %1120
      %v1122 = vsel %vm629, %v1096, 0.0
      %1123 = vadd.xlane.f32.xlu0 %v1122
      %v1124 = vpop.xlane.xlu0 %1123
      %v1125 = vsel %vm629, %v1097, 0.0
      %1126 = vadd.xlane.f32.xlu0 %v1125
      %v1127 = vpop.xlane.xlu0 %1126
      %v1128 = vsel %vm629, %v1098, 0.0
      %1129 = vadd.xlane.f32.xlu0 %v1128
      %v1130 = vpop.xlane.xlu0 %1129
      %v1131 = vsel %vm629, %v1099, 0.0
      %1132 = vadd.xlane.f32.xlu0 %v1131
      %v1133 = vpop.xlane.xlu0 %1132
      %v1134 = vsel %vm629, %v1100, 0.0
      %1135 = vadd.xlane.f32.xlu0 %v1134
      %v1136 = vpop.xlane.xlu0 %1135
      %v1137 = vsel %vm629, %v1101, 0.0
      %1138 = vadd.xlane.f32.xlu0 %v1137
      %v1139 = vpop.xlane.xlu0 %1138
      %v1140 = vsel %vm629, %v1102, 0.0
      %1141 = vadd.xlane.f32.xlu0 %v1140
      %v1142 = vpop.xlane.xlu0 %1141
      %v1143 = vsel %vm629, %v1103, 0.0
      %1144 = vadd.xlane.f32.xlu0 %v1143
      %v1145 = vpop.xlane.xlu0 %1144
      %v1146 = vsel %vm629, %v1104, 0.0
      %1147 = vadd.xlane.f32.xlu0 %v1146
      %v1148 = vpop.xlane.xlu0 %1147
      %v1149 = vsel %vm629, %v1105, 0.0
      %1150 = vadd.xlane.f32.xlu0 %v1149
      %v1151 = vpop.xlane.xlu0 %1150
      %v1152 = vsel %vm629, %v1106, 0.0
      %1153 = vadd.xlane.f32.xlu0 %v1152
      %v1154 = vpop.xlane.xlu0 %1153
      %v1155 = vlaneseq
      %v1156 = vshrl.u32 %v1155, 7
      %v1157 = vsub.s32 0, %v1156
      %v1158 = vrot.slane %v281, %v1157
      %v1159 = vadd.f32 %v1109, %v1158
      %v1160 = vadd.f32 %v1112, %v1158
      %v1161 = vadd.f32 %v1115, %v1158
      %v1162 = vadd.f32 %v1118, %v1158
      %v1163 = vadd.f32 %v1121, %v1158
      %v1164 = vadd.f32 %v1124, %v1158
      %v1165 = vadd.f32 %v1127, %v1158
      %v1166 = vadd.f32 %v1130, %v1158
      %v1167 = vadd.f32 %v1133, %v1158
      %v1168 = vadd.f32 %v1136, %v1158
      %v1169 = vadd.f32 %v1139, %v1158
      %v1170 = vadd.f32 %v1142, %v1158
      %v1171 = vadd.f32 %v1145, %v1158
      %v1172 = vadd.f32 %v1148, %v1158
      %v1173 = vadd.f32 %v1151, %v1158
      %v1174 = vadd.f32 %v1154, %v1158
      %vm1175 = vcmask 7168
      %1176 = vst.msk [vmem:[%s275] sm:$0xff] %vm1175, %v1159
      %1177 = vst.msk [vmem:[%s275 + $0x8] sm:$0xff] %vm1175, %v1160
      %1178 = vst.msk [vmem:[%s275 + $0x10] sm:$0xff] %vm1175, %v1161
      %1179 = vst.msk [vmem:[%s275 + $0x18] sm:$0xff] %vm1175, %v1162
      %1180 = vst.msk [vmem:[%s275 + $0x20] sm:$0xff] %vm1175, %v1163
      %1181 = vst.msk [vmem:[%s275 + $0x28] sm:$0xff] %vm1175, %v1164
      %1182 = vst.msk [vmem:[%s275 + $0x30] sm:$0xff] %vm1175, %v1165
      %1183 = vst.msk [vmem:[%s275 + $0x38] sm:$0xff] %vm1175, %v1166
      %1184 = vst.msk [vmem:[%s275 + $0x40] sm:$0xff] %vm1175, %v1167
      %1185 = vst.msk [vmem:[%s275 + $0x48] sm:$0xff] %vm1175, %v1168
      %1186 = vst.msk [vmem:[%s275 + $0x50] sm:$0xff] %vm1175, %v1169
      %1187 = vst.msk [vmem:[%s275 + $0x58] sm:$0xff] %vm1175, %v1170
      %1188 = vst.msk [vmem:[%s275 + $0x60] sm:$0xff] %vm1175, %v1171
      %1189 = vst.msk [vmem:[%s275 + $0x68] sm:$0xff] %vm1175, %v1172
      %1190 = vst.msk [vmem:[%s275 + $0x70] sm:$0xff] %vm1175, %v1173
      %1191 = vst.msk [vmem:[%s275 + $0x78] sm:$0xff] %vm1175, %v1174
      %s1192 = smul.u32 16, %s17
      %p1193 = scmp.lt.s32.totalorder %s1192, 31
      %s1194 = scalar_select %p1193, %s1192, 31
      %s1195 = smul.addr %s1194, 8
      %s1196 = scalar_lea.vmem %s6, %s1195
      // Predicated region
      $region45: #{critic_forward.1} parent=43 // pred_check
        %p1197 = pneg %p171
      $region46: #{critic_forward.1} parent=43 // pred_check_branch
        %1199 = sbr.rel (%p1197) target = $region48
      $region47: #{critic_forward.1} parent=43 // pred_region
        %s1200 = smul.u32 16, %s17
      $region48: #{critic_forward.1} parent=43 // pred_fallthru
        _
    $region44: #{critic_forward.1} parent=5 // pred_fallthru
      _
    %p1201 = scmp.le.s32.totalorder 2, %s12
    // Predicated region
    $region49: #{critic_forward.1} parent=5 // pred_check
      %p1202 = pneg %p1201
    $region50: #{critic_forward.1} parent=5 // pred_check_branch
      %1204 = sbr.rel (%p1202) target = $region52
    $region51: #{critic_forward.1} parent=5 // pred_region
      %s1205 = ssub.s32 %s12, 2
      // Predicated region
      $region53: #{critic_forward.1} parent=51 // pred_check
        %p1206 = pneg %p177
      $region54: #{critic_forward.1} parent=51 // pred_check_branch
        %1208 = sbr.rel (%p1206) target = $region56
      $region55: #{critic_forward.1} parent=51 // pred_region
        %s1209 = smul.u32 16, %s18
        %p1210 = scmp.lt.s32.totalorder %s1209, 31
        %s1211 = scalar_select %p1210, %s1209, 31
        %s1212 = smul.addr %s1211, 8
        %s1213 = scalar_lea.vmem %s6, %s1212
      $region56: #{critic_forward.1} parent=51 // pred_fallthru
        _
    $region52: #{critic_forward.1} parent=5 // pred_fallthru
      _
  $region6: #{critic_forward.1} parent=0 // loop_footer
    %s16 = sadd.s32 1, %s12
  $region7: #{critic_forward.1} parent=0 // loop_footer_branch
    %11 = sbr.rel target = $region3
  $region8: #{critic_forward.1} parent=0 // loop_exit
    _

</llo_original>
